<compile_context>
chip_gen: v5e
topology: v5e:2x2
jax: 0.10.0
libtpu: 0.0.40
codegen_flags: <defaults>
</compile_context>

<pallas_src>
import functools

import jax
import jax.numpy as jnp
from jax import lax
from jax.experimental import pallas as pl
from jax.experimental.pallas import tpu as pltpu


def _round_up(v, m):
    return (v + m - 1) // m * m


def _vmem_budget_bytes():
    """Per-generation VMEM budget: physical capacity minus ~12.5% headroom."""
    cap = 64 * 1024 * 1024  # safe fallback (v7x per-TC physical VMEM)
    try:
        info = pltpu.get_tpu_info()
        cap = int(getattr(info, "vmem_capacity_bytes", cap)) or cap
    except Exception:
        pass
    return cap - cap // 8  # ~56 MiB on v7x, ~112 MiB on v5e/v6e


def _resident_footprint(tm, d_in, d_hid, x_bytes):
    """Rough VMEM bytes for the whole-weight-resident path at row tile tm."""
    weights = 2 * d_in * d_hid * 2                    # bf16 W1 + W2, single buffer
    params = 4 * max(d_hid, 128) * 4                  # b1/b2/gamma/beta (f32)
    io = 4 * tm * d_in * x_bytes                      # double-buffered x + out tiles
    temps = tm * d_hid * (4 + 2) + 4 * tm * d_in * 4  # h f32 + h bf16 + epilogue temps
    return weights + params + io + temps


def _tiled_footprint(tm, tk, d_in, x_bytes):
    """Rough VMEM bytes for the d_hid-tiled path at row tile tm, hid tile tk."""
    weights = 2 * 2 * (d_in * tk + tk * d_in)         # double-buffered bf16 W1/W2 blocks
    params = 4 * max(tk, 128) * 4                     # b1 block + b2/gamma/beta
    io = 4 * tm * d_in * x_bytes                      # double-buffered x + out tiles
    temps = tm * tk * (4 + 2) + tm * d_in * 4 + 4 * tm * d_in * 4  # h, acc, epilogue
    return weights + params + io + temps


def _ffn_kernel_resident(x_ref, w1_ref, b1_ref, w2_ref, b2_ref,
                         gamma_ref, beta_ref, o_ref, *, h_bf16):
    # (TM, d_in) row tile; weights fully VMEM-resident.
    xt = x_ref[...]                                   # single tile load

    # w_1: Linear(d_in -> d_hid). bf16 MXU operands, f32 accumulation.
    h = jnp.dot(xt.astype(jnp.bfloat16), w1_ref[...],
                preferred_element_type=jnp.float32)
    if h_bf16:
        # v6e/v7x option: bias+ReLU in bf16 (packed vregs), opt-in only.
        hb = jnp.maximum(h.astype(jnp.bfloat16)
                         + b1_ref[...].astype(jnp.bfloat16), 0.0)
    else:
        hb = jnp.maximum(h + b1_ref[...], 0.0).astype(jnp.bfloat16)

    # w_2: Linear(d_hid -> d_in).
    y = jnp.dot(hb, w2_ref[...], preferred_element_type=jnp.float32) + b2_ref[...]

    # TODO(synk): dropout is identity here (eval mode); training-mode dropout
    # would use pltpu.prng_seed + pltpu.stateful_bernoulli.

    z = y + xt.astype(jnp.float32)                    # residual add (f32)

    # LayerNorm over last dim, eps=1e-6, biased variance (PyTorch semantics).
    mean = jnp.mean(z, axis=-1, keepdims=True)
    var = jnp.mean((z - mean) * (z - mean), axis=-1, keepdims=True)
    zn = (z - mean) * lax.rsqrt(var + 1e-6)
    o_ref[...] = (zn * gamma_ref[...] + beta_ref[...]).astype(o_ref.dtype)


def _ffn_kernel_tiled(x_ref, w1_ref, b1_ref, w2_ref, b2_ref,
                      gamma_ref, beta_ref, o_ref, acc_ref, *, h_bf16):
    # Grid = (row tiles, d_hid tiles). ReLU is elementwise over h, so the
    # d_hid partition of h @ W2 sums exactly to the full second matmul.
    k = pl.program_id(1)

    @pl.when(k == 0)
    def _():
        acc_ref[...] = jnp.zeros_like(acc_ref)

    xt = x_ref[...]
    h = jnp.dot(xt.astype(jnp.bfloat16), w1_ref[...],
                preferred_element_type=jnp.float32)
    if h_bf16:
        hb = jnp.maximum(h.astype(jnp.bfloat16)
                         + b1_ref[...].astype(jnp.bfloat16), 0.0)
    else:
        hb = jnp.maximum(h + b1_ref[...], 0.0).astype(jnp.bfloat16)
    acc_ref[...] += jnp.dot(hb, w2_ref[...], preferred_element_type=jnp.float32)

    @pl.when(k == pl.num_programs(1) - 1)
    def _():
        # TODO(synk): dropout is identity here (eval mode).
        z = acc_ref[...] + b2_ref[...] + xt.astype(jnp.float32)
        mean = jnp.mean(z, axis=-1, keepdims=True)
        var = jnp.mean((z - mean) * (z - mean), axis=-1, keepdims=True)
        zn = (z - mean) * lax.rsqrt(var + 1e-6)
        o_ref[...] = (zn * gamma_ref[...] + beta_ref[...]).astype(o_ref.dtype)


def positionwise_ffn(x, w1, b1, w2, b2, gamma, beta, *,
                     tm=512, tk=None, force_tiled=False, h_bf16_epilogue=False):
    """x: (batch, seq, d_in). Returns same shape/dtype."""
    batch, seq, d_in = x.shape
    d_hid = w1.shape[1]
    n = batch * seq
    x_bytes = jnp.dtype(x.dtype).itemsize

    budget = _vmem_budget_bytes()
    n8 = _round_up(max(n, 1), 8)
    tm_req = min(_round_up(tm, 8), n8)

    def _shrink(t0, fits):
        t = t0
        while t > 8 and not fits(t):
            t = _round_up(t // 2, 8)
        return t

    # Use the tiled path only when resident weights would force the row tile
    # below ~128 rows (or not fit at all) -- i.e. weights outgrow the budget.
    tm_floor = min(128, n8)
    use_tiled = force_tiled or (
        _resident_footprint(tm_floor, d_in, d_hid, x_bytes) > budget)

    if use_tiled:
        if tk is None:
            tk = next((t for t in (4096, 2048, 1024, 512, 256, 128)
                       if d_hid % t == 0), d_hid)
        if d_hid % tk != 0:
            raise ValueError(f"tk={tk} must divide d_hid={d_hid}")
        tm_eff = _shrink(
            tm_req, lambda t: _tiled_footprint(t, tk, d_in, x_bytes) <= budget)
    else:
        tm_eff = _shrink(
            tm_req, lambda t: _resident_footprint(t, d_in, d_hid, x_bytes) <= budget)

    x2d = x.reshape(n, d_in)
    w1_bf = w1.astype(jnp.bfloat16)
    w2_bf = w2.astype(jnp.bfloat16)
    b1_2d = b1.reshape(1, d_hid).astype(jnp.float32)
    b2_2d = b2.reshape(1, d_in).astype(jnp.float32)
    gamma_2d = gamma.reshape(1, d_in).astype(jnp.float32)
    beta_2d = beta.reshape(1, d_in).astype(jnp.float32)

    # Advisory cost hint for XLA scheduling around the kernel.
    weight_bytes = ((w1_bf.size + w2_bf.size) * 2
                    + (b1_2d.size + b2_2d.size + gamma_2d.size + beta_2d.size) * 4)
    cost = pl.CostEstimate(
        flops=4 * n * d_in * d_hid,          # two matmuls over all rows
        transcendentals=n,                   # ~one rsqrt per row
        bytes_accessed=2 * n * d_in * x_bytes + weight_bytes,
    )

    # Whole-array, single-buffered, VMEM-resident operand (no per-step re-DMA).
    vmem_resident = pl.BlockSpec(memory_space=pltpu.MemorySpace.VMEM)
    rows = pl.cdiv(n, tm_eff)   # ragged tail handled by the pipeline (masked)

    if not use_tiled:
        grid_spec = pltpu.PrefetchScalarGridSpec(
            num_scalar_prefetch=0,
            grid=(rows,),
            in_specs=[
                pl.BlockSpec((tm_eff, d_in), lambda i: (i, 0)),  # x row tile (pipelined)
                vmem_resident,   # W1 (bf16)
                vmem_resident,   # b1
                vmem_resident,   # W2 (bf16)
                vmem_resident,   # b2
                vmem_resident,   # gamma
                vmem_resident,   # beta
            ],
            out_specs=pl.BlockSpec((tm_eff, d_in), lambda i: (i, 0)),
        )
        kernel = functools.partial(_ffn_kernel_resident, h_bf16=h_bf16_epilogue)
        dims = ("parallel",)
    else:
        grid_spec = pltpu.PrefetchScalarGridSpec(
            num_scalar_prefetch=0,
            grid=(rows, d_hid // tk),                         # reduction axis last
            in_specs=[
                pl.BlockSpec((tm_eff, d_in), lambda i, k: (i, 0)),  # x row tile
                pl.BlockSpec((d_in, tk), lambda i, k: (0, k)),      # W1 block (bf16)
                pl.BlockSpec((1, tk), lambda i, k: (0, k)),         # b1 block
                pl.BlockSpec((tk, d_in), lambda i, k: (k, 0)),      # W2 block (bf16)
                vmem_resident,   # b2
                vmem_resident,   # gamma
                vmem_resident,   # beta
            ],
            out_specs=pl.BlockSpec((tm_eff, d_in), lambda i, k: (i, 0)),
            scratch_shapes=[pltpu.VMEM((tm_eff, d_in), jnp.float32)],  # y accumulator
        )
        kernel = functools.partial(_ffn_kernel_tiled, h_bf16=h_bf16_epilogue)
        dims = ("parallel", "arbitrary")

    out2d = pl.pallas_call(
        kernel,
        out_shape=jax.ShapeDtypeStruct((n, d_in), x.dtype),
        grid_spec=grid_spec,
        compiler_params=pltpu.CompilerParams(
            dimension_semantics=dims,
            vmem_limit_bytes=budget,        # generation-aware, with headroom
        ),
        cost_estimate=cost,
    )(x2d, w1_bf, b1_2d, w2_bf, b2_2d, gamma_2d, beta_2d)

    return out2d.reshape(batch, seq, d_in)


def reference_ffn_bf16(x, w1, b1, w2, b2, gamma, beta):
    """Mirrors the kernel's bf16-operand / f32-accumulate matmuls (tight check)."""
    h = jnp.dot(x.astype(jnp.bfloat16), w1.astype(jnp.bfloat16),
                preferred_element_type=jnp.float32) + b1
    h = jnp.maximum(h, 0.0)
    y = jnp.dot(h.astype(jnp.bfloat16), w2.astype(jnp.bfloat16),
                preferred_element_type=jnp.float32) + b2
    z = y + x
    mean = jnp.mean(z, axis=-1, keepdims=True)
    var = jnp.mean((z - mean) ** 2, axis=-1, keepdims=True)
    return (z - mean) / jnp.sqrt(var + 1e-6) * gamma + beta


def reference_ffn_f32(x, w1, b1, w2, b2, gamma, beta):
    """Full-precision PyTorch-equivalent reference (loose check)."""
    h = jnp.maximum(x @ w1 + b1, 0.0)
    y = h @ w2 + b2
    z = y + x
    mean = jnp.mean(z, axis=-1, keepdims=True)
    var = jnp.mean((z - mean) ** 2, axis=-1, keepdims=True)
    return (z - mean) / jnp.sqrt(var + 1e-6) * gamma + beta


if __name__ == "__main__":
    key = jax.random.PRNGKey(0)

    # --- config 1: small shapes, resident-weight path ------------------------
    batch, seq, d_in, d_hid = 2, 8, 32, 64
    kx, kw1, kb1, kw2, kb2 = jax.random.split(key, 5)
    x = jax.random.normal(kx, (batch, seq, d_in), dtype=jnp.float32)
    # Deterministic parameter init (shapes from nn.Linear / nn.LayerNorm).
    w1 = jax.random.normal(kw1, (d_in, d_hid), dtype=jnp.float32) * 0.05
    b1 = jax.random.normal(kb1, (d_hid,), dtype=jnp.float32) * 0.05
    w2 = jax.random.normal(kw2, (d_hid, d_in), dtype=jnp.float32) * 0.05
    b2 = jax.random.normal(kb2, (d_in,), dtype=jnp.float32) * 0.05
    gamma = jnp.ones((d_in,), dtype=jnp.float32)
    beta = jnp.zeros((d_in,), dtype=jnp.float32)

    out = jax.block_until_ready(positionwise_ffn(x, w1, b1, w2, b2, gamma, beta))
    assert out.shape == x.shape and out.dtype == x.dtype
    ref_bf16 = reference_ffn_bf16(x, w1, b1, w2, b2, gamma, beta)
    ref_f32 = reference_ffn_f32(x, w1, b1, w2, b2, gamma, beta)
    assert jnp.allclose(out, ref_bf16, atol=1e-3, rtol=1e-3), "mismatch vs bf16-matched ref"
    assert jnp.allclose(out, ref_f32, atol=5e-2, rtol=5e-2), "mismatch vs f32 ref"

    # --- config 2: ragged N (n=10; partial last block inside the grid) -------
    x_r = jax.random.normal(kx, (batch, 5, d_in), dtype=jnp.float32)
    out_r = jax.block_until_ready(positionwise_ffn(x_r, w1, b1, w2, b2, gamma, beta))
    ref_r = reference_ffn_bf16(x_r, w1, b1, w2, b2, gamma, beta)
    assert out_r.shape == x_r.shape
    assert jnp.allclose(out_r, ref_r, atol=1e-3, rtol=1e-3), "mismatch (ragged rows)"

    # --- config 3: d_hid-tiled accumulator path (forced; 2 k-steps) ----------
    d_in_t, d_hid_t, seq_t = 128, 256, 12
    kx2, kw1b, kb1b, kw2b, kb2b = jax.random.split(jax.random.PRNGKey(1), 5)
    x_t = jax.random.normal(kx2, (batch, seq_t, d_in_t), dtype=jnp.float32)
    w1_t = jax.random.normal(kw1b, (d_in_t, d_hid_t), dtype=jnp.float32) * 0.05
    b1_t = jax.random.normal(kb1b, (d_hid_t,), dtype=jnp.float32) * 0.05
    w2_t = jax.random.normal(kw2b, (d_hid_t, d_in_t), dtype=jnp.float32) * 0.05
    b2_t = jax.random.normal(kb2b, (d_in_t,), dtype=jnp.float32) * 0.05
    gamma_t = jnp.ones((d_in_t,), dtype=jnp.float32)
    beta_t = jnp.zeros((d_in_t,), dtype=jnp.float32)

    out_t = jax.block_until_ready(
        positionwise_ffn(x_t, w1_t, b1_t, w2_t, b2_t, gamma_t, beta_t,
                         force_tiled=True, tk=128))
    ref_t = reference_ffn_bf16(x_t, w1_t, b1_t, w2_t, b2_t, gamma_t, beta_t)
    assert out_t.shape == x_t.shape
    assert jnp.allclose(out_t, ref_t, atol=2e-3, rtol=2e-3), "mismatch (d_hid-tiled path)"

    print("KERNEL_OK")
</pallas_src>

<mosaic_0001>
module attributes {stable_mosaic.version = 11 : i64} {
  func.func @_ffn_kernel_resident(%arg0: i32, %arg1: memref<16x32xf32, #tpu.memory_space<vmem>>, %arg2: memref<32x64xbf16, #tpu.memory_space<vmem>>, %arg3: memref<1x64xf32, #tpu.memory_space<vmem>>, %arg4: memref<64x32xbf16, #tpu.memory_space<vmem>>, %arg5: memref<1x32xf32, #tpu.memory_space<vmem>>, %arg6: memref<1x32xf32, #tpu.memory_space<vmem>>, %arg7: memref<1x32xf32, #tpu.memory_space<vmem>>, %arg8: memref<16x32xf32, #tpu.memory_space<vmem>>) attributes {dimension_semantics = [#tpu.dimension_semantics<parallel>], iteration_bounds = array<i64: 1>, scalar_prefetch = 0 : i64, scratch_operands = 0 : i64, tpu.core_type = #tpu.core_type<tc>, window_params = [{transform_indices = @transform_0, window_bounds = array<i64: 16, 32>}, {pipeline_mode = #tpu.pipeline_mode<synchronous>, transform_indices = @transform_1, window_bounds = array<i64: 32, 64>}, {pipeline_mode = #tpu.pipeline_mode<synchronous>, transform_indices = @transform_2, window_bounds = array<i64: 1, 64>}, {pipeline_mode = #tpu.pipeline_mode<synchronous>, transform_indices = @transform_3, window_bounds = array<i64: 64, 32>}, {pipeline_mode = #tpu.pipeline_mode<synchronous>, transform_indices = @transform_4, window_bounds = array<i64: 1, 32>}, {pipeline_mode = #tpu.pipeline_mode<synchronous>, transform_indices = @transform_5, window_bounds = array<i64: 1, 32>}, {pipeline_mode = #tpu.pipeline_mode<synchronous>, transform_indices = @transform_6, window_bounds = array<i64: 1, 32>}, {transform_indices = @transform_7, window_bounds = array<i64: 16, 32>}]} {
    %c0 = arith.constant 0 : index
    %c0_0 = arith.constant 0 : index
    %0 = vector.load %arg1[%c0, %c0_0] : memref<16x32xf32, #tpu.memory_space<vmem>>, vector<16x32xf32>
    %1 = arith.truncf %0 : vector<16x32xf32> to vector<16x32xbf16>
    %c0_1 = arith.constant 0 : index
    %c0_2 = arith.constant 0 : index
    %2 = vector.load %arg2[%c0_1, %c0_2] : memref<32x64xbf16, #tpu.memory_space<vmem>>, vector<32x64xbf16>
    %cst = arith.constant dense<0.000000e+00> : vector<16x64xf32>
    %3 = tpu.matmul %1, %2, %cst {dimension_numbers = #tpu.dot_dimension_numbers<[1], [0], [0], [1], [0, 0, 1, 1], [], []>} : vector<16x32xbf16>, vector<32x64xbf16>, vector<16x64xf32> -> vector<16x64xf32>
    %c0_3 = arith.constant 0 : index
    %c0_4 = arith.constant 0 : index
    %4 = vector.load %arg3[%c0_3, %c0_4] : memref<1x64xf32, #tpu.memory_space<vmem>>, vector<1x64xf32>
    %5 = vector.broadcast %4 : vector<1x64xf32> to vector<16x64xf32>
    %6 = arith.addf %3, %5 : vector<16x64xf32>
    %cst_5 = arith.constant 0.000000e+00 : f32
    %7 = vector.broadcast %cst_5 : f32 to vector<16x64xf32>
    %8 = arith.maximumf %6, %7 : vector<16x64xf32>
    %9 = arith.truncf %8 : vector<16x64xf32> to vector<16x64xbf16>
    %c0_6 = arith.constant 0 : index
    %c0_7 = arith.constant 0 : index
    %10 = vector.load %arg4[%c0_6, %c0_7] : memref<64x32xbf16, #tpu.memory_space<vmem>>, vector<64x32xbf16>
    %cst_8 = arith.constant dense<0.000000e+00> : vector<16x32xf32>
    %11 = tpu.matmul %9, %10, %cst_8 {dimension_numbers = #tpu.dot_dimension_numbers<[1], [0], [0], [1], [0, 0, 1, 1], [], []>} : vector<16x64xbf16>, vector<64x32xbf16>, vector<16x32xf32> -> vector<16x32xf32>
    %c0_9 = arith.constant 0 : index
    %c0_10 = arith.constant 0 : index
    %12 = vector.load %arg5[%c0_9, %c0_10] : memref<1x32xf32, #tpu.memory_space<vmem>>, vector<1x32xf32>
    %13 = vector.broadcast %12 : vector<1x32xf32> to vector<16x32xf32>
    %14 = arith.addf %11, %13 : vector<16x32xf32>
    %15 = arith.addf %14, %0 : vector<16x32xf32>
    %cst_11 = arith.constant dense<0.000000e+00> : vector<16xf32>
    %16 = vector.multi_reduction <add>, %15, %cst_11 [1] : vector<16x32xf32> to vector<16xf32>
    %17 = vector.shape_cast %16 : vector<16xf32> to vector<16x1xf32>
    %cst_12 = arith.constant 3.200000e+01 : f32
    %18 = vector.broadcast %cst_12 : f32 to vector<16x1xf32>
    %19 = arith.divf %17, %18 : vector<16x1xf32>
    %20 = vector.broadcast %19 : vector<16x1xf32> to vector<16x32xf32>
    %21 = arith.subf %15, %20 : vector<16x32xf32>
    %22 = vector.broadcast %19 : vector<16x1xf32> to vector<16x32xf32>
    %23 = arith.subf %15, %22 : vector<16x32xf32>
    %24 = arith.mulf %21, %23 : vector<16x32xf32>
    %cst_13 = arith.constant dense<0.000000e+00> : vector<16xf32>
    %25 = vector.multi_reduction <add>, %24, %cst_13 [1] : vector<16x32xf32> to vector<16xf32>
    %26 = vector.shape_cast %25 : vector<16xf32> to vector<16x1xf32>
    %cst_14 = arith.constant 3.200000e+01 : f32
    %27 = vector.broadcast %cst_14 : f32 to vector<16x1xf32>
    %28 = arith.divf %26, %27 : vector<16x1xf32>
    %29 = vector.broadcast %19 : vector<16x1xf32> to vector<16x32xf32>
    %30 = arith.subf %15, %29 : vector<16x32xf32>
    %cst_15 = arith.constant 9.99999997E-7 : f32
    %31 = vector.broadcast %cst_15 : f32 to vector<16x1xf32>
    %32 = arith.addf %28, %31 : vector<16x1xf32>
    %33 = math.rsqrt %32 : vector<16x1xf32>
    %34 = vector.broadcast %33 : vector<16x1xf32> to vector<16x32xf32>
    %35 = arith.mulf %30, %34 : vector<16x32xf32>
    %c0_16 = arith.constant 0 : index
    %c0_17 = arith.constant 0 : index
    %36 = vector.load %arg6[%c0_16, %c0_17] : memref<1x32xf32, #tpu.memory_space<vmem>>, vector<1x32xf32>
    %37 = vector.broadcast %36 : vector<1x32xf32> to vector<16x32xf32>
    %38 = arith.mulf %35, %37 : vector<16x32xf32>
    %c0_18 = arith.constant 0 : index
    %c0_19 = arith.constant 0 : index
    %39 = vector.load %arg7[%c0_18, %c0_19] : memref<1x32xf32, #tpu.memory_space<vmem>>, vector<1x32xf32>
    %40 = vector.broadcast %39 : vector<1x32xf32> to vector<16x32xf32>
    %41 = arith.addf %38, %40 : vector<16x32xf32>
    %c0_20 = arith.constant 0 : index
    %c0_21 = arith.constant 0 : index
    %42 = vector.load %arg8[%c0_20, %c0_21] : memref<16x32xf32, #tpu.memory_space<vmem>>, vector<16x32xf32>
    tpu.vector_store %arg8[%c0_20, %c0_21], %41 {strides = array<i32>} : memref<16x32xf32, #tpu.memory_space<vmem>>, vector<16x32xf32>,
    return
  }
  func.func @transform_0(%arg0: i32) -> (i32, i32) {
    %c0_i32 = arith.constant 0 : i32
    %c0_i32_0 = arith.constant 0 : i32
    return %arg0, %c0_i32 : i32, i32
  }
  func.func @transform_1(%arg0: i32) -> (i32, i32) {
    %c0_i32 = arith.constant 0 : i32
    %c0_i32_0 = arith.constant 0 : i32
    %c0_i32_1 = arith.constant 0 : i32
    return %c0_i32, %c0_i32_0 : i32, i32
  }
  func.func @transform_2(%arg0: i32) -> (i32, i32) {
    %c0_i32 = arith.constant 0 : i32
    %c0_i32_0 = arith.constant 0 : i32
    %c0_i32_1 = arith.constant 0 : i32
    return %c0_i32, %c0_i32_0 : i32, i32
  }
  func.func @transform_3(%arg0: i32) -> (i32, i32) {
    %c0_i32 = arith.constant 0 : i32
    %c0_i32_0 = arith.constant 0 : i32
    %c0_i32_1 = arith.constant 0 : i32
    return %c0_i32, %c0_i32_0 : i32, i32
  }
  func.func @transform_4(%arg0: i32) -> (i32, i32) {
    %c0_i32 = arith.constant 0 : i32
    %c0_i32_0 = arith.constant 0 : i32
    %c0_i32_1 = arith.constant 0 : i32
    return %c0_i32, %c0_i32_0 : i32, i32
  }
  func.func @transform_5(%arg0: i32) -> (i32, i32) {
    %c0_i32 = arith.constant 0 : i32
    %c0_i32_0 = arith.constant 0 : i32
    %c0_i32_1 = arith.constant 0 : i32
    return %c0_i32, %c0_i32_0 : i32, i32
  }
  func.func @transform_6(%arg0: i32) -> (i32, i32) {
    %c0_i32 = arith.constant 0 : i32
    %c0_i32_0 = arith.constant 0 : i32
    %c0_i32_1 = arith.constant 0 : i32
    return %c0_i32, %c0_i32_0 : i32, i32
  }
  func.func @transform_7(%arg0: i32) -> (i32, i32) {
    %c0_i32 = arith.constant 0 : i32
    %c0_i32_0 = arith.constant 0 : i32
    return %arg0, %c0_i32 : i32, i32
  }
}

</mosaic_0001>

<llo_original>
// kernel: tpu_custom_call.1
$region0: #{tpu_custom_call.1}
  #allocation0 [shape = 'u32[]', space=smem, size = 0x4, offset = 0x4, fixed_abs, tag = 'smem constant byte address 0x4 - core index']
  #allocation1 [shape = 'u32[72,128]{1,0:T(1,128)}', space=vmem, size = 0x9000, scoped, tag = 'internal scratch']
  %s0 = inlined_call_operand.vmem [shape: f32[16,32], index: 0, kind: input, shape index: {}]
  %s1 = inlined_call_operand.vmem [shape: bf16[32,64], index: 1, kind: input, shape index: {}]
  %s2 = inlined_call_operand.vmem [shape: f32[1,64], index: 2, kind: input, shape index: {}]
  %s3 = inlined_call_operand.vmem [shape: bf16[64,32], index: 3, kind: input, shape index: {}]
  %s4 = inlined_call_operand.vmem [shape: f32[1,32], index: 4, kind: input, shape index: {}]
  %s5 = inlined_call_operand.vmem [shape: f32[1,32], index: 5, kind: input, shape index: {}]
  %s6 = inlined_call_operand.vmem [shape: f32[1,32], index: 6, kind: input, shape index: {}]
  %s7 = inlined_call_operand.hbm [shape: f32[16,32], index: 7, kind: output, shape index: {}]
  %s8 = sld [smem:[#allocation0]]
  $region38: #{tpu_custom_call.1} parent=0
    _
  %s10 = ssub.s32 1, %s8
  %s11 = scalar_select 0, %s10, %s8
  $region1: #{tpu_custom_call.1} parent=0
    #allocation2 [shape = 'u8[8192]{0}', space=vmem, size = 0x2000, scoped, tag = 'output window, operand 0, single buffered']
    #allocation3 [shape = 's32[1]{0}', space=sflag, size = 0x4, scoped, tag = 'scoped memory for tpu_custom_call.1']
    %12 = vsyncpa [#allocation3], 0
    // Predicated region
    $region2: #{tpu_custom_call.1} parent=1 // pred_check
      _
    $region3: #{tpu_custom_call.1} parent=1 // pred_check_branch
      %14 = sbr.rel (0) target = $region5
    $region4: #{tpu_custom_call.1} parent=1 // pred_region
      _
    $region5: #{tpu_custom_call.1} parent=1 // pred_fallthru
      _
    // Predicated region
    $region6: #{tpu_custom_call.1} parent=1 // pred_check
      _
    $region7: #{tpu_custom_call.1} parent=1 // pred_check_branch
      %16 = sbr.rel (0) target = $region9
    $region8: #{tpu_custom_call.1} parent=1 // pred_region
      _
    $region9: #{tpu_custom_call.1} parent=1 // pred_fallthru
      _
    // Predicated region
    $region10: #{tpu_custom_call.1} parent=1 // pred_check
      _
    $region11: #{tpu_custom_call.1} parent=1 // pred_check_branch
      %18 = sbr.rel (0) target = $region13
    $region12: #{tpu_custom_call.1} parent=1 // pred_region
      _
    $region13: #{tpu_custom_call.1} parent=1 // pred_fallthru
      _
    // Predicated region
    $region14: #{tpu_custom_call.1} parent=1 // pred_check
      _
    $region15: #{tpu_custom_call.1} parent=1 // pred_check_branch
      %20 = sbr.rel (0) target = $region17
    $region16: #{tpu_custom_call.1} parent=1 // pred_region
      _
    $region17: #{tpu_custom_call.1} parent=1 // pred_fallthru
      _
    // Predicated region
    $region18: #{tpu_custom_call.1} parent=1 // pred_check
      _
    $region19: #{tpu_custom_call.1} parent=1 // pred_check_branch
      %22 = sbr.rel (0) target = $region21
    $region20: #{tpu_custom_call.1} parent=1 // pred_region
      _
    $region21: #{tpu_custom_call.1} parent=1 // pred_fallthru
      _
    // Predicated region
    $region22: #{tpu_custom_call.1} parent=1 // pred_check
      _
    $region23: #{tpu_custom_call.1} parent=1 // pred_check_branch
      %24 = sbr.rel (0) target = $region25
    $region24: #{tpu_custom_call.1} parent=1 // pred_region
      _
    $region25: #{tpu_custom_call.1} parent=1 // pred_fallthru
      _
    // Predicated region
    $region26: #{tpu_custom_call.1} parent=1 // pred_check
      _
    $region27: #{tpu_custom_call.1} parent=1 // pred_check_branch
      %26 = sbr.rel (0) target = $region29
    $region28: #{tpu_custom_call.1} parent=1 // pred_region
      _
    $region29: #{tpu_custom_call.1} parent=1 // pred_fallthru
      _
    %v28 = vld [vmem:[%s0] sm:$0xff]
    %v29 = vld [vmem:[%s0 + $0x8] sm:$0xff]
    %v30 = vpack.c.bf16 %v29, %v28
    %v31 = vld [vmem:[%s1] sm:$0xf]
    %v32 = vld [vmem:[%s1 + $0x4] sm:$0xf]
    %v33 = vld [vmem:[%s1 + $0x8] sm:$0xf]
    %v34 = vld [vmem:[%s1 + $0xc] sm:$0xf]
    %v35 = vld [vmem:[%s2] sm:$0x1]
    %v37 = vperm.slane %v35, 0
    %v43 = vunpack.c.l.b16 %v31
    %v44 = vunpack.c.l.b16 %v32
    %v45 = vunpack.c.l.b16 %v33
    %v46 = vunpack.c.l.b16 %v34
    %v47 = vpack.c.b16 %v44, %v43
    %v48 = vpack.c.b16 %v46, %v45
    %vm51 = vcmask 261120
    %v53 = vsel %vm51, %v30, 0
    %55 = vmatpush.bf16.msra.mxu0 0
    %56 = vmatpush.bf16.msra.mxu0 0
    %57 = vmatpush.bf16.msra.mxu0 0
    %58 = vmatpush.bf16.msra.mxu0 0
    %59 = vmatpush.bf16.msra.mxu0 0
    %60 = vmatpush.bf16.msra.mxu0 0
    %61 = vmatpush.bf16.msra.mxu0 %v48
    %62 = vmatpush.bf16.msra.mxu0 %v47
    %63 = vmatmul.bf16.gmra.mxu0 %v53
    %v64 = vpop.f32.mrf.mxu0
    %v65 = vadd.f32 %v37, %v64
    %v66 = vpop.f32.mrf.mxu0
    %v67 = vadd.f32 %v37, %v66
    %68 = vdwg.mxu0
    %v69 = vmax.f32 %v65, 0.0
    %v70 = vmax.f32 %v67, 0.0
    %v71 = vpack.c.bf16 %v70, %v69
    %v72 = vld [vmem:[%s3] sm:$0xf]
    %v73 = vld [vmem:[%s3 + $0x4] sm:$0xf]
    %v74 = vld [vmem:[%s3 + $0x8] sm:$0xf]
    %v75 = vld [vmem:[%s3 + $0xc] sm:$0xf]
    %v76 = vld [vmem:[%s3 + $0x10] sm:$0xf]
    %v77 = vld [vmem:[%s3 + $0x14] sm:$0xf]
    %v78 = vld [vmem:[%s3 + $0x18] sm:$0xf]
    %v79 = vld [vmem:[%s3 + $0x1c] sm:$0xf]
    %v80 = vld [vmem:[%s4] sm:$0x1]
    %v82 = vperm.slane %v80, 0
    %v92 = vunpack.c.l.b16 %v72
    %v93 = vunpack.c.l.b16 %v73
    %v94 = vunpack.c.l.b16 %v74
    %v95 = vunpack.c.l.b16 %v75
    %v96 = vunpack.c.l.b16 %v76
    %v97 = vunpack.c.l.b16 %v77
    %v98 = vunpack.c.l.b16 %v78
    %v99 = vunpack.c.l.b16 %v79
    %v100 = vpack.c.b16 %v93, %v92
    %v101 = vpack.c.b16 %v95, %v94
    %v102 = vpack.c.b16 %v97, %v96
    %v103 = vpack.c.b16 %v99, %v98
    %vm108 = vcmask 523264
    %v110 = vsel %vm108, %v71, 0
    %112 = vmatpush.bf16.msra.mxu0 0
    %113 = vmatpush.bf16.msra.mxu0 0
    %114 = vmatpush.bf16.msra.mxu0 0
    %115 = vmatpush.bf16.msra.mxu0 0
    %116 = vmatpush.bf16.msra.mxu0 %v103
    %117 = vmatpush.bf16.msra.mxu0 %v102
    %118 = vmatpush.bf16.msra.mxu0 %v101
    %119 = vmatpush.bf16.msra.mxu0 %v100
    %120 = vmatmul.bf16.gmra.mxu0 %v110
    %v121 = vpop.f32.mrf.mxu0
    %v122 = vadd.f32 %v82, %v121
    %v123 = vpop.f32.mrf.mxu0
    %v124 = vadd.f32 %v82, %v123
    %125 = vdwg.mxu0
    %v126 = vadd.f32 %v122, %v28
    %v127 = vadd.f32 %v124, %v29
    %v128 = vsel %vm51, %v126, 0.0
    %129 = vadd.xlane.f32.xlu0 %v128
    %v130 = vpop.xlane.xlu0 %129
    %v131 = vsel %vm51, %v127, 0.0
    %132 = vadd.xlane.f32.xlu0 %v131
    %v133 = vpop.xlane.xlu0 %132
    %v134 = vrcp.pop 32.0
    %v135 = vmul.f32 32.0, %v134
    %v136 = vsub.f32 1.0, %v135
    %v137 = vmul.f32 %v134, %v136
    %v138 = vadd.f32 %v134, %v137
    %vm139 = vweird.f32 %v134
    %v140 = vsel %vm139, %v134, %v138
    %v141 = vmul.f32 %v130, %v140
    %v142 = vmul.f32 %v133, %v140
    %v143 = vsub.f32 %v126, %v141
    %v144 = vsub.f32 %v127, %v142
    %v145 = vmul.f32 %v143, %v143
    %v146 = vmul.f32 %v144, %v144
    %v147 = vsel %vm51, %v145, 0.0
    %148 = vadd.xlane.f32.xlu0 %v147
    %v149 = vpop.xlane.xlu0 %148
    %v150 = vsel %vm51, %v146, 0.0
    %151 = vadd.xlane.f32.xlu0 %v150
    %v152 = vpop.xlane.xlu0 %151
    %v153 = vmul.f32 %v149, %v140
    %v154 = vmul.f32 %v152, %v140
    %v155 = vadd.f32 %v153, 1e-06
    %v156 = vadd.f32 %v154, 1e-06
    %v157 = vrsqrt.pop %v155
    %v158 = vmul.f32 %v157, %v155
    %v159 = vmul.f32 %v158, %v157
    %v160 = vmul.f32 0.5, %v159
    %v161 = vsub.f32 1.5, %v160
    %v162 = vmul.f32 %v157, %v161
    %vm163 = vweird.f32 %v155
    %vm164 = vweird.f32 %v157
    %vm165 = vmor %vm163, %vm164
    %v166 = vsel %vm165, %v157, %v162
    %v167 = vrsqrt.pop %v156
    %v168 = vmul.f32 %v167, %v156
    %v169 = vmul.f32 %v168, %v167
    %v170 = vmul.f32 0.5, %v169
    %v171 = vsub.f32 1.5, %v170
    %v172 = vmul.f32 %v167, %v171
    %vm173 = vweird.f32 %v156
    %vm174 = vweird.f32 %v167
    %vm175 = vmor %vm173, %vm174
    %v176 = vsel %vm175, %v167, %v172
    %v177 = vmul.f32 %v143, %v166
    %v178 = vmul.f32 %v144, %v176
    %v179 = vld [vmem:[%s5] sm:$0x1]
    %v181 = vperm.slane %v179, 0
    %v183 = vmul.f32 %v177, %v181
    %v184 = vmul.f32 %v178, %v181
    %v185 = vld [vmem:[%s6] sm:$0x1]
    %v187 = vperm.slane %v185, 0
    %v189 = vadd.f32 %v183, %v187
    %v190 = vadd.f32 %v184, %v187
    %191 = vst.msk [vmem:[#allocation2] sm:$0xff] %vm51, %v189
    %192 = vst.msk [vmem:[#allocation2 + $0x8] sm:$0xff] %vm51, %v190
    // Predicated region
    $region30: #{tpu_custom_call.1} parent=1 // pred_check
      _
    $region31: #{tpu_custom_call.1} parent=1 // pred_check_branch
      %194 = sbr.rel (0) target = $region33
    $region32: #{tpu_custom_call.1} parent=1 // pred_region
      %196 = vsyncadd [#allocation3], 0
      %s197 = sshll.u32 [#allocation2], 4
      %s198 = int_to_ptr.vmem [resolvable:$true] %s197
      %s199 = sshll.u32 %s7, 4
      %s200 = int_to_ptr.hbm [resolvable:$true] %s199
      %205 = dma.vmem_to_hbm [thread:$0]  %s198, 256, %s200, [#allocation3], 128, 128, 8
    $region33: #{tpu_custom_call.1} parent=1 // pred_fallthru
      _
    // Predicated region
    $region34: #{tpu_custom_call.1} parent=1 // pred_check
      _
    $region35: #{tpu_custom_call.1} parent=1 // pred_check_branch
      %207 = sbr.rel (0) target = $region37
    $region36: #{tpu_custom_call.1} parent=1 // pred_region
      %209 = dma.done [#allocation3], 256
    $region37: #{tpu_custom_call.1} parent=1 // pred_fallthru
      _
    %210 = vsyncpa [#allocation3], 1

</llo_original>
